<compile_context>
chip_gen: v7x
topology: tpu7x:2x2x1
jax: 0.10.0
libtpu: 0.0.40
codegen_flags: <defaults>
</compile_context>

<pallas_src>
import jax
import jax.numpy as jnp
from jax.experimental import pallas as pl
from jax.experimental.pallas import tpu as pltpu


def _transition_kernel(x_ref, sb_ref, w_ref, o_ref):
    # x_ref:  (1, 4, Cin, Pt) bf16 -- 4 = unrolled 2x2 pooling window
    # sb_ref: (2, Cin, 1)     f32  -- [0] = BN scale, [1] = BN bias (batch stats)
    # w_ref:  (Cout, Cin)     bf16 -- 1x1 conv weight with the 0.25 pool factor folded in
    # o_ref:  (1, Cout, Pt)   f32  -- lane-dense output (Pt on the lane dim)
    x = x_ref[0]                                           # (4, Cin, Pt) bf16
    # bf16 * f32 promotes to f32: BN + ReLU in f32 (safe on v5e's f32-only VPU).
    a = jnp.maximum(x * sb_ref[0] + sb_ref[1], 0.0)        # (4, Cin, Pt) f32
    pooled = (a[0] + a[1]) + (a[2] + a[3])                 # 2x2 sum-pool -> (Cin, Pt) f32
    # bf16 operands + f32 accumulate -> single-pass MXU.
    o_ref[0] = jnp.dot(w_ref[...], pooled.astype(jnp.bfloat16),
                       preferred_element_type=jnp.float32).astype(o_ref.dtype)


def _plan_spatial(P, Cin, Cout, N, budget_bytes=24 * 1024 * 1024):
    """Pick (P_pad, Pt): padded flattened-spatial extent and the lane tile size.

    Budget counts double-buffered bf16 input and f32 output blocks plus the
    (conservatively double-buffered) conv weight and lane-padded scale/bias,
    so no single block can overflow VMEM (64 MiB/TC on v7x)."""
    per_p = 2 * (4 * Cin * 2) + 2 * (Cout * 4)              # bytes per output pixel
    fixed = 2 * (Cout * Cin * 2) + 2 * (2 * Cin * 128 * 4)  # w + sb operands
    cap = max(128, (budget_bytes - fixed) // max(per_p, 1))

    # Whole axis in one block: allowed even when P is not a multiple of 128.
    if P <= cap and (N >= 2 or P <= 256):
        return P, P

    # Tile the axis: pad to a multiple of 128 (lane-dense, unmasked stores).
    p_pad = -(-P // 128) * 128
    limit = min(max(128, (cap // 128) * 128), p_pad)
    pt = 128
    t = 128
    while t <= limit:
        if p_pad % t == 0:
            pt = t
        t += 128
    # v7x megacore: ensure >= 2 total grid steps when the batch is 1.
    if N * (p_pad // pt) < 2 and pt > 128:
        best = 128
        t = 128
        while t < pt:
            if p_pad % t == 0:
                best = t
            t += 128
        pt = best
    return p_pad, pt


def transition_layer(x_nchw, gamma, beta, conv_w, eps=1e-5):
    """x_nchw: (N, Cin, H, W). conv_w: (Cout, Cin, 1, 1). Returns (N, Cout, H//2, W//2) f32."""
    N, Cin, H, W = x_nchw.shape
    Cout = conv_w.shape[0]
    Ho, Wo = H // 2, W // 2
    P = Ho * Wo

    xf = x_nchw.astype(jnp.float32)

    # ---- train-mode BatchNorm batch stats on the FULL input (biased var, PyTorch semantics) ----
    # TODO(synk): the batch-stats reduction needs a full pass over x before any
    # normalization, so it stays as an XLA reduction outside the kernel.
    mean = jnp.mean(xf, axis=(0, 2, 3))                    # (Cin,)
    var = jnp.var(xf, axis=(0, 2, 3))                      # biased
    scale = gamma.astype(jnp.float32) * jax.lax.rsqrt(var + eps)
    bias = beta.astype(jnp.float32) - mean * scale
    sb = jnp.stack([scale, bias]).reshape(2, Cin, 1)       # f32, single small operand

    # ---- 1x1 conv weight with the 2x2 avg-pool 0.25 factor folded in (bf16 MXU operand) ----
    w = (0.25 * conv_w[:, :, 0, 0].astype(jnp.float32)).astype(jnp.bfloat16)  # (Cout, Cin)

    # ---- single space-to-depth pass: NCHW -> (N, 4, Cin, P), written in bf16 ----
    x_r = xf[:, :, : 2 * Ho, : 2 * Wo].reshape(N, Cin, Ho, 2, Wo, 2)
    x_r = jnp.transpose(x_r, (0, 3, 5, 1, 2, 4)).reshape(N, 4, Cin, P).astype(jnp.bfloat16)

    P_pad, Pt = _plan_spatial(P, Cin, Cout, N)
    if P_pad != P:
        x_r = jnp.pad(x_r, ((0, 0), (0, 0), (0, 0), (0, P_pad - P)))

    grid = (N, P_pad // Pt)

    out = pl.pallas_call(
        _transition_kernel,
        out_shape=jax.ShapeDtypeStruct((N, Cout, P_pad), jnp.float32),
        grid_spec=pltpu.PrefetchScalarGridSpec(
            num_scalar_prefetch=0,
            grid=grid,
            in_specs=[
                pl.BlockSpec((1, 4, Cin, Pt), lambda n, p: (n, 0, 0, p)),
                pl.BlockSpec((2, Cin, 1), lambda n, p: (0, 0, 0)),
                pl.BlockSpec((Cout, Cin), lambda n, p: (0, 0)),
            ],
            out_specs=pl.BlockSpec((1, Cout, Pt), lambda n, p: (n, 0, p)),
        ),
        compiler_params=pltpu.CompilerParams(
            dimension_semantics=("parallel", "parallel"),
            vmem_limit_bytes=48 * 1024 * 1024,
        ),
    )(x_r, sb, w)

    if P_pad != P:
        out = out[:, :, :P]
    # (N, Cout, P) is already NCHW-ordered -> free reshape, no transpose.
    return out.reshape(N, Cout, Ho, Wo)


def _reference(x, gamma, beta, conv_w, eps=1e-5):
    """Pure-JAX f32 reference mirroring PyTorch op-by-op (train-mode BN)."""
    x = x.astype(jnp.float32)
    mean = jnp.mean(x, axis=(0, 2, 3))
    var = jnp.var(x, axis=(0, 2, 3))
    xn = (x - mean[None, :, None, None]) * jax.lax.rsqrt(var + eps)[None, :, None, None]
    a = jnp.maximum(xn * gamma[None, :, None, None] + beta[None, :, None, None], 0.0)
    y = jnp.einsum("oi,nihw->nohw", conv_w[:, :, 0, 0].astype(jnp.float32), a)
    N, Co, H, W = y.shape
    Ho, Wo = H // 2, W // 2
    y = y[:, :, : 2 * Ho, : 2 * Wo]
    return y.reshape(N, Co, Ho, 2, Wo, 2).mean(axis=(3, 5))


if __name__ == "__main__":
    key = jax.random.PRNGKey(0)
    kx, kg, kb, kw, kx2 = jax.random.split(key, 5)

    # Main case: batch=2, c_in=8, c_out=4, 16x16 spatial.
    N, Cin, Cout, H, W = 2, 8, 4, 16, 16
    x = jax.random.normal(kx, (N, Cin, H, W), dtype=jnp.float32)
    gamma = 1.0 + 0.1 * jax.random.normal(kg, (Cin,), dtype=jnp.float32)
    beta = 0.1 * jax.random.normal(kb, (Cin,), dtype=jnp.float32)
    conv_w = 0.2 * jax.random.normal(kw, (Cout, Cin, 1, 1), dtype=jnp.float32)

    out = jax.block_until_ready(transition_layer(x, gamma, beta, conv_w))
    ref = jax.block_until_ready(_reference(x, gamma, beta, conv_w))
    assert out.shape == (N, Cout, H // 2, W // 2), out.shape
    # bf16 intermediate storage / MXU operands -> loosened tolerance vs f32 reference.
    assert jnp.allclose(out, ref, atol=3e-2, rtol=3e-2), float(jnp.max(jnp.abs(out - ref)))

    # Odd-spatial case: BN stats use all pixels while pooling crops (PyTorch semantics).
    x2 = jax.random.normal(kx2, (1, Cin, 7, 9), dtype=jnp.float32)
    out2 = jax.block_until_ready(transition_layer(x2, gamma, beta, conv_w))
    ref2 = jax.block_until_ready(_reference(x2, gamma, beta, conv_w))
    assert out2.shape == (1, Cout, 3, 4), out2.shape
    assert jnp.allclose(out2, ref2, atol=3e-2, rtol=3e-2), float(jnp.max(jnp.abs(out2 - ref2)))

    print("KERNEL_OK")
</pallas_src>

<mosaic_0001>
module attributes {stable_mosaic.version = 11 : i64} {
  func.func @_transition_kernel(%arg0: i32, %arg1: i32, %arg2: memref<1x4x8x64xbf16, #tpu.memory_space<vmem>>, %arg3: memref<2x8x1xf32, #tpu.memory_space<vmem>>, %arg4: memref<4x8xbf16, #tpu.memory_space<vmem>>, %arg5: memref<1x4x64xf32, #tpu.memory_space<vmem>>) attributes {dimension_semantics = [#tpu.dimension_semantics<parallel>, #tpu.dimension_semantics<parallel>], iteration_bounds = array<i64: 2, 1>, scalar_prefetch = 0 : i64, scratch_operands = 0 : i64, tpu.core_type = #tpu.core_type<tc>, window_params = [{transform_indices = @transform_0, window_bounds = array<i64: 1, 4, 8, 64>}, {pipeline_mode = #tpu.pipeline_mode<synchronous>, transform_indices = @transform_1, window_bounds = array<i64: 2, 8, 1>}, {pipeline_mode = #tpu.pipeline_mode<synchronous>, transform_indices = @transform_2, window_bounds = array<i64: 4, 8>}, {transform_indices = @transform_3, window_bounds = array<i64: 1, 4, 64>}]} {
    %c0 = arith.constant 0 : index
    %c0_0 = arith.constant 0 : index
    %c0_1 = arith.constant 0 : index
    %c0_2 = arith.constant 0 : index
    %0 = vector.load %arg2[%c0, %c0_0, %c0_1, %c0_2] : memref<1x4x8x64xbf16, #tpu.memory_space<vmem>>, vector<1x4x8x64xbf16>
    %1 = vector.shape_cast %0 : vector<1x4x8x64xbf16> to vector<4x8x64xbf16>
    %c0_3 = arith.constant 0 : index
    %c0_4 = arith.constant 0 : index
    %c0_5 = arith.constant 0 : index
    %2 = vector.load %arg3[%c0_3, %c0_4, %c0_5] : memref<2x8x1xf32, #tpu.memory_space<vmem>>, vector<1x8x1xf32>
    %3 = vector.shape_cast %2 : vector<1x8x1xf32> to vector<8x1xf32>
    %4 = arith.extf %1 : vector<4x8x64xbf16> to vector<4x8x64xf32>
    %5 = vector.shape_cast %3 : vector<8x1xf32> to vector<1x8x1xf32>
    %6 = vector.broadcast %5 : vector<1x8x1xf32> to vector<4x8x64xf32>
    %7 = arith.mulf %4, %6 : vector<4x8x64xf32>
    %c1 = arith.constant 1 : index
    %c0_6 = arith.constant 0 : index
    %c0_7 = arith.constant 0 : index
    %8 = vector.load %arg3[%c1, %c0_6, %c0_7] : memref<2x8x1xf32, #tpu.memory_space<vmem>>, vector<1x8x1xf32>
    %9 = vector.shape_cast %8 : vector<1x8x1xf32> to vector<8x1xf32>
    %10 = vector.shape_cast %9 : vector<8x1xf32> to vector<1x8x1xf32>
    %11 = vector.broadcast %10 : vector<1x8x1xf32> to vector<4x8x64xf32>
    %12 = arith.addf %7, %11 : vector<4x8x64xf32>
    %cst = arith.constant 0.000000e+00 : f32
    %13 = vector.broadcast %cst : f32 to vector<4x8x64xf32>
    %14 = arith.maximumf %12, %13 : vector<4x8x64xf32>
    %15 = vector.extract_strided_slice %14 {offsets = [0, 0, 0], sizes = [1, 8, 64], strides = [1, 1, 1]} : vector<4x8x64xf32> to vector<1x8x64xf32>
    %16 = vector.shape_cast %15 : vector<1x8x64xf32> to vector<8x64xf32>
    %17 = vector.extract_strided_slice %14 {offsets = [1, 0, 0], sizes = [1, 8, 64], strides = [1, 1, 1]} : vector<4x8x64xf32> to vector<1x8x64xf32>
    %18 = vector.shape_cast %17 : vector<1x8x64xf32> to vector<8x64xf32>
    %19 = arith.addf %16, %18 : vector<8x64xf32>
    %20 = vector.extract_strided_slice %14 {offsets = [2, 0, 0], sizes = [1, 8, 64], strides = [1, 1, 1]} : vector<4x8x64xf32> to vector<1x8x64xf32>
    %21 = vector.shape_cast %20 : vector<1x8x64xf32> to vector<8x64xf32>
    %22 = vector.extract_strided_slice %14 {offsets = [3, 0, 0], sizes = [1, 8, 64], strides = [1, 1, 1]} : vector<4x8x64xf32> to vector<1x8x64xf32>
    %23 = vector.shape_cast %22 : vector<1x8x64xf32> to vector<8x64xf32>
    %24 = arith.addf %21, %23 : vector<8x64xf32>
    %25 = arith.addf %19, %24 : vector<8x64xf32>
    %c0_8 = arith.constant 0 : index
    %c0_9 = arith.constant 0 : index
    %26 = vector.load %arg4[%c0_8, %c0_9] : memref<4x8xbf16, #tpu.memory_space<vmem>>, vector<4x8xbf16>
    %27 = arith.truncf %25 : vector<8x64xf32> to vector<8x64xbf16>
    %cst_10 = arith.constant dense<0.000000e+00> : vector<4x64xf32>
    %28 = tpu.matmul %26, %27, %cst_10 {dimension_numbers = #tpu.dot_dimension_numbers<[1], [0], [0], [1], [0, 0, 1, 1], [], []>} : vector<4x8xbf16>, vector<8x64xbf16>, vector<4x64xf32> -> vector<4x64xf32>
    %c0_11 = arith.constant 0 : index
    %c0_12 = arith.constant 0 : index
    %c0_13 = arith.constant 0 : index
    %29 = vector.load %arg5[%c0_11, %c0_12, %c0_13] : memref<1x4x64xf32, #tpu.memory_space<vmem>>, vector<1x4x64xf32>
    %30 = vector.shape_cast %29 : vector<1x4x64xf32> to vector<4x64xf32>
    %31 = vector.shape_cast %28 : vector<4x64xf32> to vector<1x4x64xf32>
    tpu.vector_store %arg5[%c0_11, %c0_12, %c0_13], %31 {strides = array<i32>} : memref<1x4x64xf32, #tpu.memory_space<vmem>>, vector<1x4x64xf32>,
    return
  }
  func.func @transform_0(%arg0: i32, %arg1: i32) -> (i32, i32, i32, i32) {
    %c0_i32 = arith.constant 0 : i32
    %c0_i32_0 = arith.constant 0 : i32
    %c0_i32_1 = arith.constant 0 : i32
    return %arg0, %c0_i32, %c0_i32_0, %arg1 : i32, i32, i32, i32
  }
  func.func @transform_1(%arg0: i32, %arg1: i32) -> (i32, i32, i32) {
    %c0_i32 = arith.constant 0 : i32
    %c0_i32_0 = arith.constant 0 : i32
    %c0_i32_1 = arith.constant 0 : i32
    %c0_i32_2 = arith.constant 0 : i32
    return %c0_i32, %c0_i32_0, %c0_i32_1 : i32, i32, i32
  }
  func.func @transform_2(%arg0: i32, %arg1: i32) -> (i32, i32) {
    %c0_i32 = arith.constant 0 : i32
    %c0_i32_0 = arith.constant 0 : i32
    %c0_i32_1 = arith.constant 0 : i32
    return %c0_i32, %c0_i32_0 : i32, i32
  }
  func.func @transform_3(%arg0: i32, %arg1: i32) -> (i32, i32, i32) {
    %c0_i32 = arith.constant 0 : i32
    %c0_i32_0 = arith.constant 0 : i32
    return %arg0, %c0_i32, %arg1 : i32, i32, i32
  }
}

</mosaic_0001>

<llo_original>
// kernel: tpu_custom_call.1
$region0: #{tpu_custom_call.1}
  #allocation0 [shape = 'u32[]', space=smem, size = 0x4, offset = 0x4, fixed_abs, tag = 'smem constant byte address 0x4 - core index']
  #allocation1 [shape = 'u32[144,128]{1,0:T(1,128)}', space=vmem, size = 0x12000, scoped, tag = 'internal scratch']
  %s0 = inlined_call_operand.hbm [shape: bf16[2,4,8,64], index: 0, kind: input, shape index: {}]
  %s1 = inlined_call_operand.vmem [shape: f32[2,8,1], index: 1, kind: input, shape index: {}]
  %s2 = inlined_call_operand.vmem [shape: bf16[4,8], index: 2, kind: input, shape index: {}]
  %s3 = inlined_call_operand.hbm [shape: f32[2,4,64], index: 3, kind: output, shape index: {}]
  %s4 = sld [smem:[#allocation0]]
  $region49: #{tpu_custom_call.1} parent=0
    _
  %s6 = ssub.s32 1, %s4
  %s7 = scalar_select 0, %s6, %s4
  $region1: #{tpu_custom_call.1} parent=0
    #allocation2 [shape = 'u8[16384]{0}', space=vmem, size = 0x4000, scoped, tag = 'input window, operand 0']
    #allocation3 [shape = 's32[2]{0}', space=sflag, size = 0x8, scoped, tag = 'scoped memory for tpu_custom_call.1']
    #allocation4 [shape = 's32[2]{0}', space=sflag, size = 0x8, scoped, tag = 'scoped memory for tpu_custom_call.1']
    #allocation5 [shape = 'u8[4096]{0}', space=vmem, size = 0x1000, scoped, tag = 'output window, operand 0']
    %8 = vsyncpa [#allocation3], 0
    %s9 = scalar_lea.sflag [#allocation3], 1
    %10 = vsyncpa %s9, 0
    %11 = vsyncpa [#allocation4], 0
    %s12 = scalar_lea.sflag [#allocation4], 1
    %13 = vsyncpa %s12, 0
    loop: start=0, step=1, limit=4
    $region2: #{tpu_custom_call.1} parent=1 // loop_pre_header
      _
    $region3: #{tpu_custom_call.1} parent=1 // loop_header
      %s15 = sphi 0, %s19
      %p16 = scmp.ge.s32.totalorder %s15, 4
      %s22 = sphi 0, %s34
      %s23 = sphi 0, %s30
      %s24 = sphi 0, %s22
      %s25 = sphi 0, %s23
      %s26 = sphi 0, %s24
      %s27 = sphi 0, %s25
      %s39 = sphi 0, %s41
      %s42 = sphi 0, %s39
      %s43 = sphi 0, %s42
      %s59 = sphi 0, %s43
      %s63 = sphi 0, %s63
      %s65 = sphi 0, %s63
      %s66 = sphi 0, %s65
      %s80 = sphi 0, %s66
      %s84 = sphi 0, %s84
      %s86 = sphi 0, %s84
      %s87 = sphi 0, %s86
      %s101 = sphi 0, %s87
      %s109 = sphi 0, %s111
      %s112 = sphi 0, %s109
      %s113 = sphi 0, %s112
      %s129 = sphi 0, %s113
    $region4: #{tpu_custom_call.1} parent=1 // loop_header_branch
      %18 = sbr.rel (%p16) target = $region8
    $region5: #{tpu_custom_call.1} parent=1 // loop_body
      %s20 = ssub.s32 %s15, 1
      %s21 = ssub.s32 %s15, 2
      %s28 = sadd.s32 1, %s23
      %p29 = scmp.ge.s32.totalorder %s28, 1
      %s30 = scalar_select %p29, 0, %s28
      %s31 = sadd.s32 1, %s22
      %s32 = scalar_select %p29, %s31, %s22
      %p33 = scmp.ge.s32.totalorder %s32, 2
      %s34 = scalar_select %p33, 0, %s32
      %s35 = ssub.s32 %s22, %s34
      %s36 = ssub.s32 %s23, %s30
      %s37 = sor.u32 %s35, %s36
      %p38 = scmp.eq.s32.totalorder %s37, 0
      %s40 = sadd.s32 %s39, 1
      %s41 = scalar_select %p38, %s39, %s40
      %p44 = pneg %p38
      %p45 = scmp.eq.s32.totalorder %s15, 1
      %p46 = por %p44, %p45
      %p47 = scmp.ne.s32.totalorder %s39, %s42
      %p48 = scmp.eq.s32.totalorder %s15, 0
      %p49 = por %p47, %p48
      %p50 = scmp.ne.s32.totalorder %s39, %s42
      %p51 = scmp.eq.s32.totalorder %s20, 1
      %p52 = por %p50, %p51
      %p53 = scmp.ne.s32.totalorder %s42, %s43
      %p54 = scmp.eq.s32.totalorder %s20, 0
      %p55 = por %p53, %p54
      %p56 = scmp.ne.s32.totalorder %s42, %s43
      %p57 = scmp.eq.s32.totalorder %s21, 1
      %p58 = por %p56, %p57
      %p60 = scmp.ne.s32.totalorder %s43, %s59
      %p61 = scmp.eq.s32.totalorder %s21, 0
      %p62 = por %p60, %p61
      %s64 = sadd.s32 %s63, 1
      %p67 = scmp.eq.s32.totalorder %s15, 1
      %p68 = scmp.ne.s32.totalorder %s63, %s65
      %p69 = scmp.eq.s32.totalorder %s15, 0
      %p70 = por %p68, %p69
      %p71 = scmp.ne.s32.totalorder %s63, %s65
      %p72 = scmp.eq.s32.totalorder %s20, 1
      %p73 = por %p71, %p72
      %p74 = scmp.ne.s32.totalorder %s65, %s66
      %p75 = scmp.eq.s32.totalorder %s20, 0
      %p76 = por %p74, %p75
      %p77 = scmp.ne.s32.totalorder %s65, %s66
      %p78 = scmp.eq.s32.totalorder %s21, 1
      %p79 = por %p77, %p78
      %p81 = scmp.ne.s32.totalorder %s66, %s80
      %p82 = scmp.eq.s32.totalorder %s21, 0
      %p83 = por %p81, %p82
      %s85 = sadd.s32 %s84, 1
      %p88 = scmp.eq.s32.totalorder %s15, 1
      %p89 = scmp.ne.s32.totalorder %s84, %s86
      %p90 = scmp.eq.s32.totalorder %s15, 0
      %p91 = por %p89, %p90
      %p92 = scmp.ne.s32.totalorder %s84, %s86
      %p93 = scmp.eq.s32.totalorder %s20, 1
      %p94 = por %p92, %p93
      %p95 = scmp.ne.s32.totalorder %s86, %s87
      %p96 = scmp.eq.s32.totalorder %s20, 0
      %p97 = por %p95, %p96
      %p98 = scmp.ne.s32.totalorder %s86, %s87
      %p99 = scmp.eq.s32.totalorder %s21, 1
      %p100 = por %p98, %p99
      %p102 = scmp.ne.s32.totalorder %s87, %s101
      %p103 = scmp.eq.s32.totalorder %s21, 0
      %p104 = por %p102, %p103
      %s105 = ssub.s32 %s22, %s34
      %s106 = ssub.s32 %s23, %s30
      %s107 = sor.u32 %s105, %s106
      %p108 = scmp.eq.s32.totalorder %s107, 0
      %s110 = sadd.s32 %s109, 1
      %s111 = scalar_select %p108, %s109, %s110
      %p114 = pneg %p108
      %p115 = scmp.eq.s32.totalorder %s15, 1
      %p116 = por %p114, %p115
      %p117 = scmp.ne.s32.totalorder %s109, %s112
      %p118 = scmp.eq.s32.totalorder %s15, 0
      %p119 = por %p117, %p118
      %p120 = scmp.ne.s32.totalorder %s109, %s112
      %p121 = scmp.eq.s32.totalorder %s20, 1
      %p122 = por %p120, %p121
      %p123 = scmp.ne.s32.totalorder %s112, %s113
      %p124 = scmp.eq.s32.totalorder %s20, 0
      %p125 = por %p123, %p124
      %p126 = scmp.ne.s32.totalorder %s112, %s113
      %p127 = scmp.eq.s32.totalorder %s21, 1
      %p128 = por %p126, %p127
      %p130 = scmp.ne.s32.totalorder %s113, %s129
      %p131 = scmp.eq.s32.totalorder %s21, 0
      %p132 = por %p130, %p131
      %p133 = scmp.le.s32.totalorder 1, %s15
      %p134 = scmp.lt.s32.totalorder %s15, 3
      %p135 = pnand %p133, %p134
      %p136 = pneg %p135
      // Predicated region
      $region9: #{tpu_custom_call.1} parent=5 // pred_check
        _
      $region10: #{tpu_custom_call.1} parent=5 // pred_check_branch
        %138 = sbr.rel (%p135) target = $region12
      $region11: #{tpu_custom_call.1} parent=5 // pred_region
        %s139 = ssub.s32 %s15, 1
        // Predicated region
        $region13: #{tpu_custom_call.1} parent=11 // pred_check
          %p140 = pneg %p76
        $region14: #{tpu_custom_call.1} parent=11 // pred_check_branch
          %142 = sbr.rel (%p140) target = $region16
        $region15: #{tpu_custom_call.1} parent=11 // pred_region
          _
        $region16: #{tpu_custom_call.1} parent=11 // pred_fallthru
          _
        // Predicated region
        $region17: #{tpu_custom_call.1} parent=11 // pred_check
          %p143 = pneg %p97
        $region18: #{tpu_custom_call.1} parent=11 // pred_check_branch
          %145 = sbr.rel (%p143) target = $region20
        $region19: #{tpu_custom_call.1} parent=11 // pred_region
          _
        $region20: #{tpu_custom_call.1} parent=11 // pred_fallthru
          _
      $region12: #{tpu_custom_call.1} parent=5 // pred_fallthru
        _
      %p146 = scmp.lt.s32.totalorder %s15, 2
      // Predicated region
      $region21: #{tpu_custom_call.1} parent=5 // pred_check
        %p147 = pneg %p146
      $region22: #{tpu_custom_call.1} parent=5 // pred_check_branch
        %149 = sbr.rel (%p147) target = $region24
      $region23: #{tpu_custom_call.1} parent=5 // pred_region
        // Predicated region
        $region25: #{tpu_custom_call.1} parent=23 // pred_check
          %p150 = pneg %p49
        $region26: #{tpu_custom_call.1} parent=23 // pred_check_branch
          %152 = sbr.rel (%p150) target = $region28
        $region27: #{tpu_custom_call.1} parent=23 // pred_region
          %s153 = sand.u32 %s39, 1
          %s154 = scalar_lea.sflag [#allocation3], %s153
          %s155 = sand.u32 %s39, 1
          %s156 = smul.addr %s155, 16
          %s157 = scalar_lea.vmem [#allocation2], %s156
          %s159 = ssub.s32 256, 256
          %160 = vsyncadd %s154, %s159
          %s161 = smul.addr %s22, 4
          %s162 = sadd.s32 %s23, %s161
          %s163 = smul.addr %s162, 64
          %s164 = scalar_lea.hbm %s0, %s163
          %s165 = sshll.u32 %s157, 4
          %s166 = int_to_ptr.vmem [resolvable:$true] %s165
          %171 = dma.hbm_to_vmem [thread:$0]  %s164, 256, %s166, %s154, 64, 64, 4
        $region28: #{tpu_custom_call.1} parent=23 // pred_fallthru
          _
      $region24: #{tpu_custom_call.1} parent=5 // pred_fallthru
        _
      %p172 = scmp.le.s32.totalorder 1, %s15
      %p173 = scmp.lt.s32.totalorder %s15, 3
      %p174 = pnand %p172, %p173
      %p175 = pneg %p174
      // Predicated region
      $region29: #{tpu_custom_call.1} parent=5 // pred_check
        _
      $region30: #{tpu_custom_call.1} parent=5 // pred_check_branch
        %177 = sbr.rel (%p174) target = $region32
      $region31: #{tpu_custom_call.1} parent=5 // pred_region
        %s178 = ssub.s32 %s15, 1
        %s179 = sand.u32 %s42, 1
        %s180 = scalar_lea.sflag [#allocation3], %s179
        %s181 = sand.u32 %s42, 1
        %s182 = smul.addr %s181, 16
        %s183 = scalar_lea.vmem [#allocation2], %s182
        // Predicated region
        $region33: #{tpu_custom_call.1} parent=31 // pred_check
          %p184 = pneg %p55
        $region34: #{tpu_custom_call.1} parent=31 // pred_check_branch
          %186 = sbr.rel (%p184) target = $region36
        $region35: #{tpu_custom_call.1} parent=31 // pred_region
          %187 = dma.done %s180, 256
        $region36: #{tpu_custom_call.1} parent=31 // pred_fallthru
          _
        %s188 = sand.u32 %s42, 1
        %s189 = scalar_lea.sflag [#allocation3], %s188
        %s190 = sand.u32 %s42, 1
        %s191 = smul.addr %s190, 16
        %s192 = scalar_lea.vmem [#allocation2], %s191
        %p193 = pneg %p55
        %p194 = pneg %p52
        %p195 = pneg %p76
        %p196 = pneg %p73
        %p197 = pneg %p97
        %p198 = pneg %p94
        %p199 = pneg %p125
        %p200 = pneg %p122
        %s201 = sand.u32 %s112, 1
        %s202 = scalar_lea.sflag [#allocation4], %s201
        %s203 = sand.u32 %s112, 1
        %s204 = smul.addr %s203, 4
        %s205 = scalar_lea.vmem [#allocation5], %s204
        %v207 = vld [vmem:[%s183] sm:$0xf]
        %v208 = vld [vmem:[%s183 + $0x4] sm:$0xf]
        %v209 = vld [vmem:[%s183 + $0x8] sm:$0xf]
        %v210 = vld [vmem:[%s183 + $0xc] sm:$0xf]
        %v211 = vld [vmem:[%s1] sm:$0xff]
        %v212 = vunpack.c.l.bf16 %v207
        %v213 = vunpack.c.l.bf16 %v208
        %v214 = vunpack.c.l.bf16 %v209
        %v215 = vunpack.c.l.bf16 %v210
        %217 = vset.pattern.permute.xlu0 0
        %218 = vperm.xlu0 %217, %v211
        %v219 = vpop.permute.xlu0 %218
        %v221 = vmul.f32 %v212, %v219
        %v222 = vmul.f32 %v213, %v219
        %v223 = vmul.f32 %v214, %v219
        %v224 = vmul.f32 %v215, %v219
        %s225 = scalar_lea.vmem %s1, 8
        %v226 = vld [vmem:[%s225] sm:$0xff]
        %228 = vset.pattern.permute.xlu0 0
        %229 = vperm.xlu0 %228, %v226
        %v230 = vpop.permute.xlu0 %229
        %v232 = vadd.f32 %v221, %v230
        %v233 = vadd.f32 %v222, %v230
        %v234 = vadd.f32 %v223, %v230
        %v235 = vadd.f32 %v224, %v230
        %v236 = vmax.f32 %v232, 0.0
        %v237 = vmax.f32 %v233, 0.0
        %v238 = vmax.f32 %v234, 0.0
        %v239 = vmax.f32 %v235, 0.0
        %v240 = vadd.f32 %v236, %v237
        %v241 = vadd.f32 %v238, %v239
        %v242 = vadd.f32 %v240, %v241
        %v243 = vld [vmem:[%s2] sm:$0x3]
        %v244 = vpack.c.bf16 %v242, %v242
        %vm245 = vcmask 64512
        %v247 = vsel %vm245, %v243, 0
        %vm249 = vcmask 1043456
        %v251 = vsel %vm249, %v244, 0
        %253 = vmatprep.subr.bf16.mxu0 0
        %254 = vmatpush1.bf16.msra.mxu0 %v251
        %255 = vmatprep.subr.bf16.mxu0 0
        %256 = vmatpush1.bf16.msra.mxu0 0
        %257 = vmatprep.subr.bf16.mxu0 0
        %258 = vmatpush1.bf16.msra.mxu0 0
        %259 = vmatprep.subr.bf16.mxu0 0
        %260 = vmatpush1.bf16.msra.mxu0 0
        %261 = vmatprep.subr.bf16.mxu0 0
        %262 = vmatpush1.bf16.msra.mxu0 0
        %263 = vmatprep.subr.bf16.mxu0 0
        %264 = vmatpush1.bf16.msra.mxu0 0
        %265 = vmatprep.subr.bf16.mxu0 0
        %266 = vmatpush1.bf16.msra.mxu0 0
        %267 = vmatprep.subr.bf16.mxu0 0
        %268 = vmatpush1.bf16.msra.mxu0 0
        %269 = vmatprep.subr.bf16.mxu0 0
        %270 = vmatpush1.bf16.msra.mxu0 0
        %271 = vmatprep.subr.bf16.mxu0 0
        %272 = vmatpush1.bf16.msra.mxu0 0
        %273 = vmatprep.subr.bf16.mxu0 0
        %274 = vmatpush1.bf16.msra.mxu0 0
        %275 = vmatprep.subr.bf16.mxu0 0
        %276 = vmatpush1.bf16.msra.mxu0 0
        %277 = vmatprep.subr.bf16.mxu0 0
        %278 = vmatpush1.bf16.msra.mxu0 0
        %279 = vmatprep.subr.bf16.mxu0 0
        %280 = vmatpush1.bf16.msra.mxu0 0
        %281 = vmatprep.subr.bf16.mxu0 0
        %282 = vmatpush1.bf16.msra.mxu0 0
        %283 = vmatprep.subr.bf16.mxu0 0
        %284 = vmatpush1.bf16.msra.mxu0 0
        %285 = vmatprep.mubr.bf16.mxu0 0
        %286 = vmatmul.mubr.bf16.gmra.mrb[0].mxu0 %v247
        %v287 = vpop.f32.mrb[0].mxu0
        %v288 = vadd.f32 0.0, %v287
        %v289 = vpop.f32.mrb[0].mxu0
        %v290 = vpop.f32.mrb[0].mxu0
        %v291 = vpop.f32.mrb[0].mxu0
        %292 = vdwg.mxu0
        %vm293 = vcmask 519168
        %294 = vst.msk [vmem:[%s205] sm:$0xf] %vm293, %v288
        %s295 = sand.u32 %s112, 1
        %s296 = scalar_lea.sflag [#allocation4], %s295
        %s297 = sand.u32 %s112, 1
        %s298 = smul.addr %s297, 4
        %s299 = scalar_lea.vmem [#allocation5], %s298
        // Predicated region
        $region37: #{tpu_custom_call.1} parent=31 // pred_check
          %p300 = pneg %p122
        $region38: #{tpu_custom_call.1} parent=31 // pred_check_branch
          %302 = sbr.rel (%p300) target = $region40
        $region39: #{tpu_custom_call.1} parent=31 // pred_region
          %s304 = ssub.s32 64, 64
          %305 = vsyncadd %s296, %s304
          %s306 = sadd.s32 %s25, %s24
          %s307 = smul.addr %s306, 64
          %s308 = scalar_lea.hbm %s3, %s307
          %s310 = sshll.u32 %s299, 4
          %s311 = int_to_ptr.vmem [resolvable:$true] %s310
          %313 = dma.vmem_to_hbm [thread:$0]  %s311, 64, %s308, %s296
        $region40: #{tpu_custom_call.1} parent=31 // pred_fallthru
          _
      $region32: #{tpu_custom_call.1} parent=5 // pred_fallthru
        _
      %p314 = scmp.le.s32.totalorder 2, %s15
      // Predicated region
      $region41: #{tpu_custom_call.1} parent=5 // pred_check
        %p315 = pneg %p314
      $region42: #{tpu_custom_call.1} parent=5 // pred_check_branch
        %317 = sbr.rel (%p315) target = $region44
      $region43: #{tpu_custom_call.1} parent=5 // pred_region
        %s318 = ssub.s32 %s15, 2
        // Predicated region
        $region45: #{tpu_custom_call.1} parent=43 // pred_check
          %p319 = pneg %p128
        $region46: #{tpu_custom_call.1} parent=43 // pred_check_branch
          %321 = sbr.rel (%p319) target = $region48
        $region47: #{tpu_custom_call.1} parent=43 // pred_region
          %s322 = sand.u32 %s113, 1
          %s323 = scalar_lea.sflag [#allocation4], %s322
          %s324 = sand.u32 %s113, 1
          %s325 = smul.addr %s324, 4
          %s326 = scalar_lea.vmem [#allocation5], %s325
          %327 = dma.done %s323, 64
        $region48: #{tpu_custom_call.1} parent=43 // pred_fallthru
          _
      $region44: #{tpu_custom_call.1} parent=5 // pred_fallthru
        _
    $region6: #{tpu_custom_call.1} parent=1 // loop_footer
      %s19 = sadd.s32 1, %s15
    $region7: #{tpu_custom_call.1} parent=1 // loop_footer_branch
      %14 = sbr.rel target = $region3
    $region8: #{tpu_custom_call.1} parent=1 // loop_exit
      _
    %328 = vsyncpa [#allocation3], 1
    %s329 = scalar_lea.sflag [#allocation3], 1
    %330 = vsyncpa %s329, 1
    %331 = vsyncpa [#allocation4], 1
    %s332 = scalar_lea.sflag [#allocation4], 1
    %333 = vsyncpa %s332, 1

</llo_original>
